<compile_context>
chip_gen: v7x
topology: tpu7x:2x2x1
jax: 0.10.0
libtpu: 0.0.40
codegen_flags: <defaults>
</compile_context>

<pallas_src>
import functools

import jax
import jax.numpy as jnp
from jax.experimental import pallas as pl
from jax.experimental.pallas import tpu as pltpu


# Tile caps; actual tiles are divisor-aligned to the real (128-padded) dims.
BLOCK_M = 512    # batch-tile cap (multiple of 8)
BLOCK_N = 1024   # hidden-tile cap (multiple of 128)
BLOCK_K = 512    # reduction-tile cap, used only when full-K misses VMEM


def _round_up(v, m):
    return (v + m - 1) // m * m


def _cdiv(a, b):
    return -(-a // b)


def _pick_divisor_tile(dim128, max_tile, min_tiles=1):
    """Largest multiple-of-128 divisor of dim128 (itself a multiple of 128)
    that is <= max_tile and yields at least min_tiles tiles."""
    best = 128
    for t in range(128, dim128 + 1, 128):
        if dim128 % t == 0 and t <= max_tile and dim128 // t >= min_tiles:
            best = t
    return best


def _vmem_capacity_bytes():
    try:
        info = pltpu.get_tpu_info()
        cap = int(getattr(info, "vmem_capacity_bytes", 0))
        if cap > 0:
            return cap
    except Exception:
        pass
    return 64 * 1024 * 1024   # v7x per-TensorCore VMEM; safe lower bound


# ----------------------------- kernels --------------------------------------


def _swiglu_kernel_fullk(x_ref, w_ref, b_ref, o_ref, *, tn):
    # grid = (M tiles, N tiles); the full K dim is contracted in one MXU pass,
    # so there is no accumulator RMW and no init/finalize gating.
    # x_ref: [tm, K128]   w_ref: [K128, 2*tn]   b_ref: [1, 2*tn] (f32)
    h = jnp.dot(x_ref[...], w_ref[...], preferred_element_type=jnp.float32)
    h1 = h[:, :tn] + b_ref[:, :tn]           # lane-aligned halves, f32
    h2 = h[:, tn:] + b_ref[:, tn:]
    o_ref[...] = (h1 * (h2 * jax.nn.sigmoid(h2))).astype(o_ref.dtype)


def _swiglu_kernel_acc(x_ref, w_ref, b_ref, o_ref, acc_ref, *, tn):
    # grid = (M, N, K); f32 VMEM accumulator lives across the trailing K axis.
    k = pl.program_id(2)

    @pl.when(k == 0)
    def _():
        acc_ref[...] = jnp.zeros_like(acc_ref)

    acc_ref[...] += jnp.dot(x_ref[...], w_ref[...],
                            preferred_element_type=jnp.float32)

    @pl.when(k == pl.num_programs(2) - 1)
    def _():
        h1 = acc_ref[:, :tn] + b_ref[:, :tn]   # per-half epilogue (no full-
        h2 = acc_ref[:, tn:] + b_ref[:, tn:]   # width f32 temporary)
        o_ref[...] = (h1 * (h2 * jax.nn.sigmoid(h2))).astype(o_ref.dtype)


# --------------------------- parameter packing -------------------------------


def prepare_swiglu_params(w1, b1, w2, b2, *, block_n=BLOCK_N,
                          compute_dtype=jnp.bfloat16):
    """Pack PyTorch-layout weights ([hidden, in]) / biases ([hidden]) into the
    fused, 128-padded operands the kernel expects.  Call ONCE outside the hot
    path (this is where the transpose / bf16 cast lives) and reuse the result.

    Returns (w_fused [K128, 2*N128] compute_dtype, b_fused [1, 2*N128] f32,
    n_out, tn)."""
    n_out, k_in = w1.shape
    dtype = jnp.dtype(compute_dtype) if compute_dtype is not None else w1.dtype

    n128 = _round_up(n_out, 128)
    k128 = _round_up(k_in, 128)
    # >= 2 N-tiles whenever possible -> parallel-axis product >= 2 even when
    # grid_m == 1 (v7x megacore); neutral on v5e/v6e.
    tn = _pick_divisor_tile(n128, block_n, min_tiles=2 if n128 >= 256 else 1)
    nj = n128 // tn

    def pack_w(w):
        wt = w.astype(dtype).T                                    # [K, N]
        return jnp.pad(wt, ((0, k128 - k_in), (0, n128 - n_out)))

    w1t = pack_w(w1).reshape(k128, nj, tn)
    w2t = pack_w(w2).reshape(k128, nj, tn)
    # Block-interleave per tn-tile: fused tile j = [W1_j | W2_j], width 2*tn.
    w_fused = jnp.stack([w1t, w2t], axis=2).reshape(k128, 2 * n128)

    def pack_b(b):
        return jnp.pad(b.astype(jnp.float32), (0, n128 - n_out)).reshape(nj, tn)

    b_fused = jnp.stack([pack_b(b1), pack_b(b2)], axis=1).reshape(1, 2 * n128)
    return w_fused, b_fused, n_out, tn


# ------------------------------- wrapper -------------------------------------


@functools.partial(
    jax.jit,
    static_argnames=("n_out", "tn", "block_m", "block_k", "out_dtype",
                     "weight_buffers"))
def swiglu_pallas(x, w_fused, b_fused, *, n_out, tn, block_m=BLOCK_M,
                  block_k=BLOCK_K, out_dtype=None, weight_buffers=2):
    """x: [B, K]; (w_fused, b_fused, n_out, tn) from prepare_swiglu_params.
    out_dtype: set to jnp.bfloat16 when the downstream consumer is bf16 to
    halve output HBM writeback (default: x.dtype)."""
    batch, k_in = x.shape
    k_pad, two_n_pad = w_fused.shape
    n_pad = two_n_pad // 2
    assert n_pad % tn == 0 and k_pad % 128 == 0

    out_dt = jnp.dtype(x.dtype if out_dtype is None else out_dtype)
    cbytes = jnp.dtype(w_fused.dtype).itemsize
    obytes = out_dt.itemsize

    # --- M tiling: pad batch only to the 8-sublane granule, then split into
    # cdiv(batch, block_m) near-equal tiles (no round-up-to-block padding).
    m8 = _round_up(batch, 8)
    num_m = _cdiv(m8, block_m)
    tm = _round_up(_cdiv(m8, num_m), 8)
    m_pad = tm * num_m

    # --- K tiling: full-K (grid_k == 1, no accumulator) when it fits the VMEM
    # budget, otherwise the largest fitting 128-multiple divisor <= block_k.
    budget = _vmem_capacity_bytes() // 2

    def footprint(tk_, with_acc):
        f = 2 * (tm * tk_ + tk_ * 2 * tn) * cbytes    # double-buffered x / W
        f += 2 * (2 * tn) * 4                         # bias (f32)
        f += 2 * tm * tn * obytes                     # double-buffered output
        if with_acc:
            f += tm * 2 * tn * 4                      # f32 accumulator
        return f

    if footprint(k_pad, False) <= budget:
        tk = k_pad
    else:
        tk = 128
        for t in range(128, min(block_k, k_pad) + 1, 128):
            if k_pad % t == 0 and footprint(t, True) <= budget:
                tk = t
    single_k = (tk == k_pad)

    # Declare the actual footprint (plus headroom), not a blanket claim.
    vmem_limit = min(budget,
                     max(8 * 1024 * 1024,
                         int(footprint(tk, not single_k) * 1.25) + (2 << 20)))

    xp = x.astype(w_fused.dtype)
    if m_pad != batch or k_pad != k_in:
        xp = jnp.pad(xp, ((0, m_pad - batch), (0, k_pad - k_in)))

    # Optional deeper buffering of the weight stream (only if profiling shows
    # the weight DMA is still exposed -- sweep, don't assume).
    w_kwargs = {} if weight_buffers == 2 else {
        "pipeline_mode": pl.Buffered(weight_buffers)}

    if single_k:
        grid = (m_pad // tm, n_pad // tn)
        in_specs = [
            pl.BlockSpec((tm, tk), lambda i, j: (i, 0)),                 # x
            pl.BlockSpec((tk, 2 * tn), lambda i, j: (0, j), **w_kwargs),  # W
            pl.BlockSpec((1, 2 * tn), lambda i, j: (0, j)),              # bias
        ]
        out_spec = pl.BlockSpec((tm, tn), lambda i, j: (i, j))
        scratch = ()
        kernel = functools.partial(_swiglu_kernel_fullk, tn=tn)
        semantics = ("parallel", "parallel")
    else:
        grid = (m_pad // tm, n_pad // tn, k_pad // tk)
        in_specs = [
            pl.BlockSpec((tm, tk), lambda i, j, k: (i, k)),                 # x
            pl.BlockSpec((tk, 2 * tn), lambda i, j, k: (k, j), **w_kwargs),  # W
            pl.BlockSpec((1, 2 * tn), lambda i, j, k: (0, j)),              # b
        ]
        out_spec = pl.BlockSpec((tm, tn), lambda i, j, k: (i, j))
        scratch = (pltpu.VMEM((tm, 2 * tn), jnp.float32),)
        kernel = functools.partial(_swiglu_kernel_acc, tn=tn)
        semantics = ("parallel", "parallel", "arbitrary")

    out = pl.pallas_call(
        kernel,
        out_shape=jax.ShapeDtypeStruct((m_pad, n_pad), out_dt),
        grid_spec=pltpu.PrefetchScalarGridSpec(
            num_scalar_prefetch=0,
            grid=grid,
            in_specs=in_specs,
            out_specs=out_spec,
            scratch_shapes=scratch,
        ),
        compiler_params=pltpu.CompilerParams(
            dimension_semantics=semantics,
            vmem_limit_bytes=vmem_limit,
        ),
    )(xp, w_fused, b_fused)

    return out[:batch, :n_out]


def swiglu(x, w1, b1, w2, b2, *, compute_dtype=jnp.bfloat16, **kw):
    """Convenience wrapper (prep + kernel).  For repeated calls, hoist
    prepare_swiglu_params out of the loop and call swiglu_pallas directly."""
    w_fused, b_fused, n_out, tn = prepare_swiglu_params(
        w1, b1, w2, b2, compute_dtype=compute_dtype)
    lead = x.shape[:-1]
    out = swiglu_pallas(x.reshape(-1, x.shape[-1]), w_fused, b_fused,
                        n_out=n_out, tn=tn, **kw)
    return out.reshape(*lead, n_out)


# ------------------------------ reference ------------------------------------


def swiglu_ref(x, w1, b1, w2, b2, precision=None):
    h1 = jnp.dot(x, w1.T, precision=precision) + b1
    h2 = jnp.dot(x, w2.T, precision=precision) + b2
    return h1 * (h2 * jax.nn.sigmoid(h2))


def _bf16_operand_ref(x, w1, b1, w2, b2):
    # Same bf16 operand rounding as the kernel; accumulation / SiLU stay f32.
    c = lambda a: a.astype(jnp.bfloat16).astype(jnp.float32)
    return swiglu_ref(c(x), c(w1), b1, c(w2), b2,
                      precision=jax.lax.Precision.HIGHEST)


if __name__ == "__main__":
    key = jax.random.PRNGKey(0)

    # --- Small shape consistent with the module: batch=8, in=32, hidden=64 ---
    batch, input_dim, hidden_dim = 8, 32, 64
    kx, kw1, kb1, kw2, kb2, key = jax.random.split(key, 6)
    x = jax.random.normal(kx, (batch, input_dim), dtype=jnp.float32)
    w1 = jax.random.normal(kw1, (hidden_dim, input_dim), dtype=jnp.float32) * 0.1
    b1 = jax.random.normal(kb1, (hidden_dim,), dtype=jnp.float32) * 0.1
    w2 = jax.random.normal(kw2, (hidden_dim, input_dim), dtype=jnp.float32) * 0.1
    b2 = jax.random.normal(kb2, (hidden_dim,), dtype=jnp.float32) * 0.1

    out = jax.block_until_ready(swiglu(x, w1, b1, w2, b2))
    ref = _bf16_operand_ref(x, w1, b1, w2, b2)
    assert out.shape == (batch, hidden_dim)
    assert jnp.allclose(out, ref, atol=5e-3, rtol=5e-3), "small-shape mismatch"

    # --- Larger shape: exercises divisor tiling, padding, multi-tile N grid ---
    batch, input_dim, hidden_dim = 300, 640, 1280
    kx, kw1, kb1, kw2, kb2, key = jax.random.split(key, 6)
    x = jax.random.normal(kx, (batch, input_dim), dtype=jnp.float32)
    w1 = jax.random.normal(kw1, (hidden_dim, input_dim), dtype=jnp.float32) * 0.05
    b1 = jax.random.normal(kb1, (hidden_dim,), dtype=jnp.float32) * 0.05
    w2 = jax.random.normal(kw2, (hidden_dim, input_dim), dtype=jnp.float32) * 0.05
    b2 = jax.random.normal(kb2, (hidden_dim,), dtype=jnp.float32) * 0.05

    w_fused, b_fused, n_out, tn = prepare_swiglu_params(w1, b1, w2, b2)
    out = jax.block_until_ready(
        swiglu_pallas(x, w_fused, b_fused, n_out=n_out, tn=tn))
    ref = _bf16_operand_ref(x, w1, b1, w2, b2)
    assert out.shape == (batch, hidden_dim)
    assert jnp.allclose(out, ref, atol=1e-2, rtol=1e-2), "large-shape mismatch"

    print("KERNEL_OK")
</pallas_src>

<mosaic_0001>
module attributes {stable_mosaic.version = 11 : i64} {
  func.func @_swiglu_kernel_fullk(%arg0: i32, %arg1: i32, %arg2: memref<8x128xbf16, #tpu.memory_space<vmem>>, %arg3: memref<128x256xbf16, #tpu.memory_space<vmem>>, %arg4: memref<1x256xf32, #tpu.memory_space<vmem>>, %arg5: memref<8x128xf32, #tpu.memory_space<vmem>>) attributes {dimension_semantics = [#tpu.dimension_semantics<parallel>, #tpu.dimension_semantics<parallel>], iteration_bounds = array<i64: 1, 1>, scalar_prefetch = 0 : i64, scratch_operands = 0 : i64, tpu.core_type = #tpu.core_type<tc>, window_params = [{transform_indices = @transform_0, window_bounds = array<i64: 8, 128>}, {transform_indices = @transform_1, window_bounds = array<i64: 128, 256>}, {transform_indices = @transform_2, window_bounds = array<i64: 1, 256>}, {transform_indices = @transform_3, window_bounds = array<i64: 8, 128>}]} {
    %c0 = arith.constant 0 : index
    %c0_0 = arith.constant 0 : index
    %0 = vector.load %arg2[%c0, %c0_0] : memref<8x128xbf16, #tpu.memory_space<vmem>>, vector<8x128xbf16>
    %c0_1 = arith.constant 0 : index
    %c0_2 = arith.constant 0 : index
    %1 = vector.load %arg3[%c0_1, %c0_2] : memref<128x256xbf16, #tpu.memory_space<vmem>>, vector<128x256xbf16>
    %cst = arith.constant dense<0.000000e+00> : vector<8x256xf32>
    %2 = tpu.matmul %0, %1, %cst {dimension_numbers = #tpu.dot_dimension_numbers<[1], [0], [0], [1], [0, 0, 1, 1], [], []>} : vector<8x128xbf16>, vector<128x256xbf16>, vector<8x256xf32> -> vector<8x256xf32>
    %3 = vector.extract_strided_slice %2 {offsets = [0, 0], sizes = [8, 128], strides = [1, 1]} : vector<8x256xf32> to vector<8x128xf32>
    %c0_3 = arith.constant 0 : index
    %c0_4 = arith.constant 0 : index
    %4 = vector.load %arg4[%c0_3, %c0_4] : memref<1x256xf32, #tpu.memory_space<vmem>>, vector<1x128xf32>
    %5 = vector.broadcast %4 : vector<1x128xf32> to vector<8x128xf32>
    %6 = arith.addf %3, %5 : vector<8x128xf32>
    %7 = vector.extract_strided_slice %2 {offsets = [0, 128], sizes = [8, 128], strides = [1, 1]} : vector<8x256xf32> to vector<8x128xf32>
    %c0_5 = arith.constant 0 : index
    %c128 = arith.constant 128 : index
    %8 = vector.load %arg4[%c0_5, %c128] : memref<1x256xf32, #tpu.memory_space<vmem>>, vector<1x128xf32>
    %9 = vector.broadcast %8 : vector<1x128xf32> to vector<8x128xf32>
    %10 = arith.addf %7, %9 : vector<8x128xf32>
    %11 = arith.negf %10 : vector<8x128xf32>
    %12 = math.exp %11 : vector<8x128xf32>
    %cst_6 = arith.constant 1.000000e+00 : f32
    %13 = vector.broadcast %cst_6 : f32 to vector<8x128xf32>
    %14 = arith.addf %13, %12 : vector<8x128xf32>
    %15 = arith.divf %13, %14 : vector<8x128xf32>
    %16 = arith.mulf %10, %15 : vector<8x128xf32>
    %17 = arith.mulf %6, %16 : vector<8x128xf32>
    %c0_7 = arith.constant 0 : index
    %c0_8 = arith.constant 0 : index
    %18 = vector.load %arg5[%c0_7, %c0_8] : memref<8x128xf32, #tpu.memory_space<vmem>>, vector<8x128xf32>
    tpu.vector_store %arg5[%c0_7, %c0_8], %17 {strides = array<i32>} : memref<8x128xf32, #tpu.memory_space<vmem>>, vector<8x128xf32>,
    return
  }
  func.func @transform_0(%arg0: i32, %arg1: i32) -> (i32, i32) {
    %c0_i32 = arith.constant 0 : i32
    %c0_i32_0 = arith.constant 0 : i32
    return %arg0, %c0_i32 : i32, i32
  }
  func.func @transform_1(%arg0: i32, %arg1: i32) -> (i32, i32) {
    %c0_i32 = arith.constant 0 : i32
    %c0_i32_0 = arith.constant 0 : i32
    return %c0_i32, %arg1 : i32, i32
  }
  func.func @transform_2(%arg0: i32, %arg1: i32) -> (i32, i32) {
    %c0_i32 = arith.constant 0 : i32
    %c0_i32_0 = arith.constant 0 : i32
    return %c0_i32, %arg1 : i32, i32
  }
  func.func @transform_3(%arg0: i32, %arg1: i32) -> (i32, i32) {
    %c0_i32 = arith.constant 0 : i32
    return %arg0, %arg1 : i32, i32
  }
}

</mosaic_0001>

<llo_original>
// kernel: swiglu_pallas.1
$region0: #{swiglu_pallas.1}
  #allocation0 [shape = 'u32[]', space=smem, size = 0x4, offset = 0x4, fixed_abs, tag = 'smem constant byte address 0x4 - core index']
  #allocation1 [shape = 'u32[144,128]{1,0:T(1,128)}', space=vmem, size = 0x12000, scoped, tag = 'internal scratch']
  %s0 = inlined_call_operand.vmem [shape: bf16[8,128], index: 0, kind: input, shape index: {}]
  %s1 = inlined_call_operand.hbm [shape: bf16[128,256], index: 1, kind: input, shape index: {}]
  %s2 = inlined_call_operand.vmem [shape: f32[1,256], index: 2, kind: input, shape index: {}]
  %s3 = inlined_call_operand.hbm [shape: f32[8,128], index: 3, kind: output, shape index: {}]
  %s4 = sld [smem:[#allocation0]]
  $region26: #{swiglu_pallas.1} parent=0
    _
  %s6 = ssub.s32 1, %s4
  %s7 = scalar_select 0, %s6, %s4
  $region1: #{swiglu_pallas.1} parent=0
    #allocation2 [shape = 'u8[65536]{0}', space=vmem, size = 0x10000, scoped, tag = 'input window, operand 1, single buffered']
    #allocation3 [shape = 's32[1]{0}', space=sflag, size = 0x4, scoped, tag = 'scoped memory for swiglu_pallas.1']
    #allocation4 [shape = 's32[1]{0}', space=sflag, size = 0x4, scoped, tag = 'scoped memory for swiglu_pallas.1']
    #allocation5 [shape = 'u8[4096]{0}', space=vmem, size = 0x1000, scoped, tag = 'output window, operand 0, single buffered']
    %8 = vsyncpa [#allocation3], 0
    %9 = vsyncpa [#allocation4], 0
    // Predicated region
    $region2: #{swiglu_pallas.1} parent=1 // pred_check
      _
    $region3: #{swiglu_pallas.1} parent=1 // pred_check_branch
      %11 = sbr.rel (0) target = $region5
    $region4: #{swiglu_pallas.1} parent=1 // pred_region
      _
    $region5: #{swiglu_pallas.1} parent=1 // pred_fallthru
      _
    // Predicated region
    $region6: #{swiglu_pallas.1} parent=1 // pred_check
      _
    $region7: #{swiglu_pallas.1} parent=1 // pred_check_branch
      %13 = sbr.rel (0) target = $region9
    $region8: #{swiglu_pallas.1} parent=1 // pred_region
      %s15 = ssub.s32 2048, 2048
      %16 = vsyncadd [#allocation3], %s15
      %s17 = sshll.u32 [#allocation2], 4
      %s18 = int_to_ptr.vmem [resolvable:$true] %s17
      %23 = dma.hbm_to_vmem [thread:$0]  %s1, 2048, %s18, [#allocation3], 128, 128, 8
    $region9: #{swiglu_pallas.1} parent=1 // pred_fallthru
      _
    // Predicated region
    $region10: #{swiglu_pallas.1} parent=1 // pred_check
      _
    $region11: #{swiglu_pallas.1} parent=1 // pred_check_branch
      %25 = sbr.rel (0) target = $region13
    $region12: #{swiglu_pallas.1} parent=1 // pred_region
      _
    $region13: #{swiglu_pallas.1} parent=1 // pred_fallthru
      _
    // Predicated region
    $region14: #{swiglu_pallas.1} parent=1 // pred_check
      _
    $region15: #{swiglu_pallas.1} parent=1 // pred_check_branch
      %27 = sbr.rel (0) target = $region17
    $region16: #{swiglu_pallas.1} parent=1 // pred_region
      %28 = dma.done [#allocation3], 2048
    $region17: #{swiglu_pallas.1} parent=1 // pred_fallthru
      _
    %v30 = vld [vmem:[%s0] sm:$0xf]
    %v31 = vld [vmem:[#allocation2] sm:$0xff]
    %v32 = vld [vmem:[#allocation2 + $0x8] sm:$0xff]
    %v33 = vld [vmem:[#allocation2 + $0x10] sm:$0xff]
    %v34 = vld [vmem:[#allocation2 + $0x18] sm:$0xff]
    %v35 = vld [vmem:[#allocation2 + $0x20] sm:$0xff]
    %v36 = vld [vmem:[#allocation2 + $0x28] sm:$0xff]
    %v37 = vld [vmem:[#allocation2 + $0x30] sm:$0xff]
    %v38 = vld [vmem:[#allocation2 + $0x38] sm:$0xff]
    %v39 = vld [vmem:[#allocation2 + $0x40] sm:$0xff]
    %v40 = vld [vmem:[#allocation2 + $0x48] sm:$0xff]
    %v41 = vld [vmem:[#allocation2 + $0x50] sm:$0xff]
    %v42 = vld [vmem:[#allocation2 + $0x58] sm:$0xff]
    %v43 = vld [vmem:[#allocation2 + $0x60] sm:$0xff]
    %v44 = vld [vmem:[#allocation2 + $0x68] sm:$0xff]
    %v45 = vld [vmem:[#allocation2 + $0x70] sm:$0xff]
    %v46 = vld [vmem:[#allocation2 + $0x78] sm:$0xff]
    %v63 = vunpack.c.l.b16 %v31
    %v64 = vunpack.c.h.b16 %v31
    %v65 = vunpack.c.l.b16 %v32
    %v66 = vunpack.c.h.b16 %v32
    %v67 = vunpack.c.l.b16 %v33
    %v68 = vunpack.c.h.b16 %v33
    %v69 = vunpack.c.l.b16 %v34
    %v70 = vunpack.c.h.b16 %v34
    %v71 = vunpack.c.l.b16 %v35
    %v72 = vunpack.c.h.b16 %v35
    %v73 = vunpack.c.l.b16 %v36
    %v74 = vunpack.c.h.b16 %v36
    %v75 = vunpack.c.l.b16 %v37
    %v76 = vunpack.c.h.b16 %v37
    %v77 = vunpack.c.l.b16 %v38
    %v78 = vunpack.c.h.b16 %v38
    %v79 = vunpack.c.l.b16 %v39
    %v80 = vunpack.c.h.b16 %v39
    %v81 = vunpack.c.l.b16 %v40
    %v82 = vunpack.c.h.b16 %v40
    %v83 = vunpack.c.l.b16 %v41
    %v84 = vunpack.c.h.b16 %v41
    %v85 = vunpack.c.l.b16 %v42
    %v86 = vunpack.c.h.b16 %v42
    %v87 = vunpack.c.l.b16 %v43
    %v88 = vunpack.c.h.b16 %v43
    %v89 = vunpack.c.l.b16 %v44
    %v90 = vunpack.c.h.b16 %v44
    %v91 = vunpack.c.l.b16 %v45
    %v92 = vunpack.c.h.b16 %v45
    %v93 = vunpack.c.l.b16 %v46
    %v94 = vunpack.c.h.b16 %v46
    %v95 = vpack.c.b16 %v65, %v63
    %v96 = vpack.c.b16 %v66, %v64
    %v97 = vpack.c.b16 %v69, %v67
    %v98 = vpack.c.b16 %v70, %v68
    %v99 = vpack.c.b16 %v73, %v71
    %v100 = vpack.c.b16 %v74, %v72
    %v101 = vpack.c.b16 %v77, %v75
    %v102 = vpack.c.b16 %v78, %v76
    %v103 = vpack.c.b16 %v81, %v79
    %v104 = vpack.c.b16 %v82, %v80
    %v105 = vpack.c.b16 %v85, %v83
    %v106 = vpack.c.b16 %v86, %v84
    %v107 = vpack.c.b16 %v89, %v87
    %v108 = vpack.c.b16 %v90, %v88
    %v109 = vpack.c.b16 %v93, %v91
    %v110 = vpack.c.b16 %v94, %v92
    %127 = vmatprep.subr.bf16.mxu0 %v96
    %128 = vmatpush1.bf16.msra.mxu0 %v95
    %129 = vmatprep.subr.bf16.mxu0 %v98
    %130 = vmatpush1.bf16.msra.mxu0 %v97
    %131 = vmatprep.subr.bf16.mxu0 %v100
    %132 = vmatpush1.bf16.msra.mxu0 %v99
    %133 = vmatprep.subr.bf16.mxu0 %v102
    %134 = vmatpush1.bf16.msra.mxu0 %v101
    %135 = vmatprep.subr.bf16.mxu0 %v104
    %136 = vmatpush1.bf16.msra.mxu0 %v103
    %137 = vmatprep.subr.bf16.mxu0 %v106
    %138 = vmatpush1.bf16.msra.mxu0 %v105
    %139 = vmatprep.subr.bf16.mxu0 %v108
    %140 = vmatpush1.bf16.msra.mxu0 %v107
    %141 = vmatprep.subr.bf16.mxu0 %v110
    %142 = vmatpush1.bf16.msra.mxu0 %v109
    %143 = vmatprep.subr.bf16.mxu0 0
    %144 = vmatpush1.bf16.msra.mxu0 0
    %145 = vmatprep.subr.bf16.mxu0 0
    %146 = vmatpush1.bf16.msra.mxu0 0
    %147 = vmatprep.subr.bf16.mxu0 0
    %148 = vmatpush1.bf16.msra.mxu0 0
    %149 = vmatprep.subr.bf16.mxu0 0
    %150 = vmatpush1.bf16.msra.mxu0 0
    %151 = vmatprep.subr.bf16.mxu0 0
    %152 = vmatpush1.bf16.msra.mxu0 0
    %153 = vmatprep.subr.bf16.mxu0 0
    %154 = vmatpush1.bf16.msra.mxu0 0
    %155 = vmatprep.subr.bf16.mxu0 0
    %156 = vmatpush1.bf16.msra.mxu0 0
    %157 = vmatprep.subr.bf16.mxu0 0
    %158 = vmatpush1.bf16.msra.mxu0 0
    %159 = vmatprep.mubr.bf16.mxu0 0
    %160 = vmatmul.mubr.bf16.gmra.mrb[0].mxu0 %v30
    %v161 = vpop.f32.mrb[0].mxu0
    %v162 = vadd.f32 0.0, %v161
    %v163 = vpop.f32.mrb[0].mxu0
    %v164 = vadd.f32 0.0, %v163
    %v165 = vpop.f32.mrb[0].mxu0
    %v166 = vpop.f32.mrb[0].mxu0
    %167 = vdwg.mxu0
    %v168 = vld [vmem:[%s2] sm:$0x1]
    %v170 = vlaneseq
    %v171 = vshrl.u32 %v170, 7
    %v172 = vsub.s32 0, %v171
    %v173 = vrot.slane %v168, %v172
    %v175 = vadd.f32 %v162, %v173
    %v176 = vld [vmem:[%s2 + $0x1] sm:$0x1]
    %v178 = vlaneseq
    %v179 = vshrl.u32 %v178, 7
    %v180 = vsub.s32 0, %v179
    %v181 = vrot.slane %v176, %v180
    %v183 = vadd.f32 %v164, %v181
    %v184 = vxor.u32 %v183, 2147483648
    %v185 = vmul.f32 %v184, 1.442695
    %v186 = vpow.pop %v185
    %v187 = vadd.f32 %v186, 1.0
    %v188 = vrcp.pop %v187
    %v189 = vmul.f32 1.0, %v188
    %v190 = vmul.f32 %v183, %v189
    %v191 = vmul.f32 %v175, %v190
    %192 = vst [vmem:[#allocation5] sm:$0xff] %v191
    // Predicated region
    $region18: #{swiglu_pallas.1} parent=1 // pred_check
      _
    $region19: #{swiglu_pallas.1} parent=1 // pred_check_branch
      %194 = sbr.rel (0) target = $region21
    $region20: #{swiglu_pallas.1} parent=1 // pred_region
      %s196 = ssub.s32 128, 128
      %197 = vsyncadd [#allocation4], %s196
      %s199 = sshll.u32 [#allocation5], 4
      %s200 = int_to_ptr.vmem [resolvable:$true] %s199
      %202 = dma.vmem_to_hbm [thread:$0]  %s200, 128, %s3, [#allocation4]
    $region21: #{swiglu_pallas.1} parent=1 // pred_fallthru
      _
    // Predicated region
    $region22: #{swiglu_pallas.1} parent=1 // pred_check
      _
    $region23: #{swiglu_pallas.1} parent=1 // pred_check_branch
      %204 = sbr.rel (0) target = $region25
    $region24: #{swiglu_pallas.1} parent=1 // pred_region
      %205 = dma.done [#allocation4], 128
    $region25: #{swiglu_pallas.1} parent=1 // pred_fallthru
      _
    %206 = vsyncpa [#allocation3], 1
    %207 = vsyncpa [#allocation4], 1

</llo_original>
